<compile_context>
chip_gen: v5e
topology: v5e:2x2
jax: 0.10.0
libtpu: 0.0.40
codegen_flags: <defaults>
</compile_context>

<pallas_src>
import functools

import jax
import jax.numpy as jnp
from jax.experimental import pallas as pl
from jax.experimental.pallas import tpu as pltpu

LN_EPS = 1e-5  # torch.nn.LayerNorm default


# ---------------------------------------------------------------------------
# helpers
# ---------------------------------------------------------------------------
def _round_up(n, m):
    return ((n + m - 1) // m) * m


def _sublane_packing(itemsize):
    # native sublane packing of the activation dtype: 8 (f32), 16 (bf16), 32 (int8/fp8)
    return max(8, 32 // max(int(itemsize), 1))


def _layernorm(x, gamma, beta):
    # Two-pass (torch-style) formulation: var = E[(x - mean)^2].  More stable than
    # E[x^2] - mean^2 for large post-matmul activations (review correctness note).
    mean = jnp.mean(x, axis=-1, keepdims=True)
    xc = x - mean
    var = jnp.mean(xc * xc, axis=-1, keepdims=True)
    return xc * jax.lax.rsqrt(var + LN_EPS) * gamma + beta


def _gelu(x, kind):
    if kind == "tanh":
        # tanh-approx GELU: transcendental goes to the EUP slot (effectively free when the
        # VALU binds), computed in the matmul-operand dtype (bf16 on the fast path).
        return jax.nn.gelu(x, approximate=True)
    # exact erf GELU (torch.nn.GELU() default) for parity checks
    return 0.5 * x * (1.0 + jax.lax.erf(x * 0.7071067811865476))


# ---------------------------------------------------------------------------
# kernel A: resident-weight plan (w1/w2 + LN packs live in VMEM across the batch grid)
# ---------------------------------------------------------------------------
def _resident_kernel(gelu, x_ref, w1_ref, ln1_ref, w2_ref, ln2_ref, o_ref):
    x = x_ref[...]                                      # (tb, D)
    residual = x.astype(jnp.float32)
    ln1 = ln1_ref[...].astype(jnp.float32)              # (3, H): [bias; gamma; beta]
    ln2 = ln2_ref[...].astype(jnp.float32)              # (3, D)

    # linear1 (bf16 operands on the fast path, f32 MXU accumulation) + LayerNorm(H)
    h = jnp.dot(x.astype(w1_ref.dtype), w1_ref[...], preferred_element_type=jnp.float32)
    h = _layernorm(h + ln1[0:1, :], ln1[1:2, :], ln1[2:3, :])

    # GELU after the downcast to the matmul operand dtype (halves VALU work on v6e/v7x)
    g = _gelu(h.astype(w2_ref.dtype), gelu)
    # TODO(synk): dropout omitted (inference / eval mode -> identity); no training path.

    # linear2 + LayerNorm(D) over (y + residual)
    y = jnp.dot(g, w2_ref[...], preferred_element_type=jnp.float32)
    out = _layernorm(y + ln2[0:1, :] + residual, ln2[1:2, :], ln2[2:3, :])
    o_ref[...] = out.astype(o_ref.dtype)


# ---------------------------------------------------------------------------
# kernel B: hidden-dim-tiled plan for large D*H (weights streamed in chunks)
#   grid = (batch tile i, phase p, hidden chunk j)
#   p == 0: h[j] = x @ w1[:, j] + b1[j]; accumulate LN1 sum / sum-of-squares
#   p == 1: acc += GELU(LN1(h[j])) @ w2[j]; finalize LN2(acc + b2 + residual) at last chunk
# ---------------------------------------------------------------------------
def _tiled_kernel(gelu, x_ref, w1_ref, ln1_ref, w2_ref, ln2_ref, o_ref,
                  h_ref, acc_ref, sum_ref, ssq_ref):
    p = pl.program_id(1)
    j = pl.program_id(2)
    n_chunks = pl.num_programs(2)
    hidden = ln1_ref.shape[0] * ln1_ref.shape[2]         # K * tc == H (static)

    @pl.when((p == 0) & (j == 0))
    def _init_stats():
        sum_ref[...] = jnp.zeros_like(sum_ref)
        ssq_ref[...] = jnp.zeros_like(ssq_ref)

    @pl.when((p == 1) & (j == 0))
    def _init_acc():
        acc_ref[...] = jnp.zeros_like(acc_ref)

    @pl.when(p == 0)
    def _compute_hidden_chunk():
        lnc = ln1_ref[j].astype(jnp.float32)              # (3, tc): [b1; gamma1; beta1] chunk
        h = jnp.dot(x_ref[...].astype(w1_ref.dtype), w1_ref[...],
                    preferred_element_type=jnp.float32) + lnc[0:1, :]
        h_ref[j] = h
        sum_ref[...] += jnp.sum(h, axis=-1, keepdims=True)
        ssq_ref[...] += jnp.sum(h * h, axis=-1, keepdims=True)

    @pl.when(p == 1)
    def _contract_chunk():
        # LayerNorm(H) stats from the streamed sum / sum-of-squares (single pass by necessity)
        inv_h = 1.0 / float(hidden)
        mean = sum_ref[...] * inv_h
        var = jnp.maximum(ssq_ref[...] * inv_h - mean * mean, 0.0)
        inv = jax.lax.rsqrt(var + LN_EPS)
        lnc = ln1_ref[j].astype(jnp.float32)
        g = (h_ref[j] - mean) * inv * lnc[1:2, :] + lnc[2:3, :]
        g = _gelu(g.astype(w2_ref.dtype), gelu)
        acc_ref[...] += jnp.dot(g, w2_ref[...], preferred_element_type=jnp.float32)

    @pl.when((p == 1) & (j == n_chunks - 1))
    def _finalize():
        ln2 = ln2_ref[...].astype(jnp.float32)
        y = acc_ref[...] + ln2[0:1, :] + x_ref[...].astype(jnp.float32)
        o_ref[...] = _layernorm(y, ln2[1:2, :], ln2[2:3, :]).astype(o_ref.dtype)


# ---------------------------------------------------------------------------
# VMEM / tile planning (generation-aware)
# ---------------------------------------------------------------------------
def _vmem_capacity_bytes():
    try:
        cap = getattr(pltpu.get_tpu_info(), "vmem_capacity_bytes", None)
        if cap:
            return int(cap)
    except Exception:
        pass
    return 64 << 20  # conservative fallback: v7x per-TensorCore VMEM


def _vmem_plan(D, H, act_bytes, w_bytes, tiled, tc, single_buffer):
    """Rough (fixed_bytes, per_batch_row_bytes) working-set model for tile selection + limit."""
    ln_packs = (8 * H + 8 * D) * 4                              # (3,*) f32 packs, sublane-padded
    if tiled:
        fixed = 2 * 2 * D * tc * w_bytes + ln_packs             # double-buffered weight chunks
        per_row = (2 * 2 * D * act_bytes                        # x + out, double buffered
                   + (H + D + 8) * 4                            # h / acc / stat scratch (f32)
                   + 2 * max(D, tc) * 4)                        # live f32 temporaries
    else:
        wbuf = 1 if single_buffer else 2
        fixed = wbuf * 2 * D * H * w_bytes + ln_packs           # resident w1 + w2
        per_row = (2 * 2 * D * act_bytes                        # x + out, double buffered
                   + 3 * max(D, H) * 4)                         # f32 intermediates
    return fixed + (2 << 20), per_row


def _auto_tile_b(B, sub, fixed, per_row, cap):
    budget = int(0.85 * cap) - fixed
    b_cap = _round_up(B, sub)
    for tb in (1024, 512, 256, 128, 64, 32, 16, 8):
        if tb % sub == 0 and tb * per_row <= budget:
            return min(tb, b_cap)
    return min(b_cap, max(sub, 8))


# ---------------------------------------------------------------------------
# wrapper
# ---------------------------------------------------------------------------
@functools.partial(
    jax.jit,
    static_argnames=("gelu", "tile_b", "tile_h", "force_tiled", "single_buffer_weights"))
def _residual_mlp(x, params, *, gelu, tile_b, tile_h, force_tiled, single_buffer_weights):
    B, D = x.shape
    H = params["w1"].shape[1]
    w_dtype = params["w1"].dtype
    act_bytes = jnp.dtype(x.dtype).itemsize
    w_bytes = jnp.dtype(w_dtype).itemsize
    cap = _vmem_capacity_bytes()
    sub = _sublane_packing(act_bytes)

    # fuse (bias, gamma, beta) per layer into one (3, F) f32 array (2 DMAs instead of 6)
    ln1 = jnp.concatenate(
        [params["b1"].reshape(1, H), params["g1"].reshape(1, H),
         params["be1"].reshape(1, H)], axis=0).astype(jnp.float32)
    ln2 = jnp.concatenate(
        [params["b2"].reshape(1, D), params["g2"].reshape(1, D),
         params["be2"].reshape(1, D)], axis=0).astype(jnp.float32)

    # --- choose plan: resident weights vs hidden-dim-tiled --------------------------------
    wbuf = 1 if single_buffer_weights else 2
    resident_bytes = wbuf * 2 * D * H * w_bytes
    use_tiled = bool(force_tiled) or resident_bytes > int(0.7 * cap)
    if use_tiled and H % 128 != 0:
        use_tiled = False  # TODO(synk): pad H (and tile D) to extend the streamed-weight plan.
    tc = 0
    if use_tiled:
        if tile_h is not None:
            tc = int(tile_h)
        else:
            tc = 128
            for c in (512, 256):
                if H % c == 0 and 4 * D * c * w_bytes <= int(0.25 * cap):
                    tc = c
                    break
        if H % tc != 0:
            raise ValueError(f"tile_h={tc} must divide hidden_size={H}")

    fixed, per_row = _vmem_plan(D, H, act_bytes, w_bytes, use_tiled, tc, single_buffer_weights)
    if tile_b is None:
        tb = _auto_tile_b(B, sub, fixed, per_row, cap)
    else:
        tb = max(sub, _round_up(min(int(tile_b), _round_up(B, sub)), sub))

    B_pad = _round_up(B, tb)
    if B_pad != B:
        x = jnp.pad(x, ((0, B_pad - B), (0, 0)))   # padded rows are benign; sliced off below
    nb = B_pad // tb

    # generation-aware VMEM budget: never below the modelled requirement, capped at physical
    need = fixed + tb * per_row
    vmem_limit = int(min(max(need, int(0.8 * cap)), cap))

    flops = 4 * B_pad * D * H                                   # two matmuls @ 2*B*D*H each
    bytes_accessed = 2 * B_pad * D * act_bytes + 2 * D * H * w_bytes + 6 * (H + D) * 4
    # transcendentals: tanh GELU (EUP) per hidden element + 2 rsqrt per row; exact erf is a
    # VALU polynomial, not an EUP op, so it is not counted here (review fix).
    transcendentals = (B_pad * H if gelu == "tanh" else 0) + 2 * B_pad
    cost = pl.CostEstimate(flops=int(flops), transcendentals=int(transcendentals),
                           bytes_accessed=int(bytes_accessed))

    def _const_spec(shape, n_axes):
        zeros = (0,) * len(shape)
        imap = (lambda i: zeros) if n_axes == 1 else (lambda i, p, j: zeros)
        if single_buffer_weights:
            # constant-index operands need no double buffering -> halve their VMEM footprint
            return pl.BlockSpec(shape, imap, pipeline_mode=pl.Buffered(buffer_count=1))
        return pl.BlockSpec(shape, imap)

    if not use_tiled:
        out = pl.pallas_call(
            functools.partial(_resident_kernel, gelu),
            out_shape=jax.ShapeDtypeStruct((B_pad, D), x.dtype),
            grid=(nb,),
            in_specs=[
                pl.BlockSpec((tb, D), lambda i: (i, 0)),    # x: streamed per batch tile
                _const_spec((D, H), 1),                     # w1 (pre-transposed), resident
                _const_spec((3, H), 1),                     # [b1; gamma1; beta1]
                _const_spec((H, D), 1),                     # w2 (pre-transposed), resident
                _const_spec((3, D), 1),                     # [b2; gamma2; beta2]
            ],
            out_specs=pl.BlockSpec((tb, D), lambda i: (i, 0)),
            compiler_params=pltpu.CompilerParams(
                # batch axis is independent -> megacore sharding on multi-TC parts
                # TODO(synk): evaluate pltpu.CORE_PARALLEL explicitly on v7x (2 TCs/chip).
                dimension_semantics=("parallel",),
                vmem_limit_bytes=vmem_limit),
            cost_estimate=cost,
        )(x, params["w1"], ln1, params["w2"], ln2)
        return out[:B]

    # ---- hidden-dim-tiled plan -----------------------------------------------------------
    k_chunks = H // tc
    ln1_chunks = ln1.reshape(3, k_chunks, tc).transpose(1, 0, 2)       # (K, 3, tc)
    out = pl.pallas_call(
        functools.partial(_tiled_kernel, gelu),
        out_shape=jax.ShapeDtypeStruct((B_pad, D), x.dtype),
        grid=(nb, 2, k_chunks),
        in_specs=[
            pl.BlockSpec((tb, D), lambda i, p, j: (i, 0)),             # x: resident per batch tile
            # w1 column chunk: streamed in phase 0, parked on chunk 0 in phase 1
            pl.BlockSpec((D, tc), lambda i, p, j: (0, j * (1 - p))),
            _const_spec((k_chunks, 3, tc), 3),                         # LN1 pack, resident
            # w2 row chunk: parked on chunk 0 in phase 0, streamed in phase 1
            pl.BlockSpec((tc, D), lambda i, p, j: (j * p, 0)),
            _const_spec((3, D), 3),                                    # LN2 pack, resident
        ],
        out_specs=pl.BlockSpec((tb, D), lambda i, p, j: (i, 0)),
        scratch_shapes=[
            pltpu.VMEM((k_chunks, tb, tc), jnp.float32),               # h = linear1 out + b1
            pltpu.VMEM((tb, D), jnp.float32),                          # linear2 accumulator
            pltpu.VMEM((tb, 1), jnp.float32),                          # LN1 running sum
            pltpu.VMEM((tb, 1), jnp.float32),                          # LN1 running sum-of-squares
        ],
        compiler_params=pltpu.CompilerParams(
            dimension_semantics=("parallel", "arbitrary", "arbitrary"),
            vmem_limit_bytes=vmem_limit),
        cost_estimate=cost,
    )(x, params["w1"], ln1_chunks, params["w2"], ln2)
    return out[:B]


def residual_mlp(x, params, *, gelu="tanh", tile_b=None, tile_h=None, force_tiled=False):
    """ResidualMLP forward (eval mode). Weights may be f32 or bf16 (recommended fast path);
    biases / LayerNorm vectors stay f32. Retries with double-buffered weights if the installed
    JAX does not accept BlockSpec pipeline_mode."""
    kwargs = dict(gelu=gelu, tile_b=tile_b, tile_h=tile_h, force_tiled=force_tiled)
    try:
        return _residual_mlp(x, params, single_buffer_weights=True, **kwargs)
    except Exception:  # pragma: no cover — older JAX without pipeline_mode support
        return _residual_mlp(x, params, single_buffer_weights=False, **kwargs)


# ---------------------------------------------------------------------------
# params / reference
# ---------------------------------------------------------------------------
def init_params(key, input_size, hidden_size, dtype=jnp.float32):
    """torch.nn.Linear default init (U(+-1/sqrt(fan_in))); LayerNorm gamma=1, beta=0.
    Weights are stored pre-transposed to (in, out). Use cast_weights(..., jnp.bfloat16) for the
    recommended full-rate MXU operand path."""
    k1, k2, k3, k4 = jax.random.split(key, 4)
    lim1 = 1.0 / float(input_size) ** 0.5
    lim2 = 1.0 / float(hidden_size) ** 0.5
    return {
        "w1": jax.random.uniform(k1, (input_size, hidden_size), dtype, -lim1, lim1),
        "b1": jax.random.uniform(k2, (1, hidden_size), dtype, -lim1, lim1),
        "g1": jnp.ones((1, hidden_size), dtype),
        "be1": jnp.zeros((1, hidden_size), dtype),
        "w2": jax.random.uniform(k3, (hidden_size, input_size), dtype, -lim2, lim2),
        "b2": jax.random.uniform(k4, (1, input_size), dtype, -lim2, lim2),
        "g2": jnp.ones((1, input_size), dtype),
        "be2": jnp.zeros((1, input_size), dtype),
    }


def cast_weights(params, dtype=jnp.bfloat16):
    """Matmul-operand copy of the weights (default bf16: full-rate MXU, half the HBM/VMEM
    bytes). Biases / LayerNorm parameters stay f32."""
    p = dict(params)
    p["w1"] = params["w1"].astype(dtype)
    p["w2"] = params["w2"].astype(dtype)
    return p


def residual_mlp_ref(x, p, gelu="exact"):
    """Plain-JAX f32 reference of the PyTorch forward (eval mode)."""
    h = x @ p["w1"].astype(jnp.float32) + p["b1"].astype(jnp.float32)
    h = _layernorm(h, p["g1"].astype(jnp.float32), p["be1"].astype(jnp.float32))
    h = _gelu(h, gelu)
    y = h @ p["w2"].astype(jnp.float32) + p["b2"].astype(jnp.float32)
    return _layernorm(y + x, p["g2"].astype(jnp.float32), p["be2"].astype(jnp.float32))


if __name__ == "__main__":
    B, INPUT_SIZE, HIDDEN_SIZE = 8, 128, 256
    key = jax.random.PRNGKey(0)
    kx, kp = jax.random.split(key)
    x = jax.random.normal(kx, (B, INPUT_SIZE), jnp.float32)

    params_f32 = init_params(kp, INPUT_SIZE, HIDDEN_SIZE)
    params_bf16 = cast_weights(params_f32, jnp.bfloat16)

    ref_exact = residual_mlp_ref(x, params_f32, gelu="exact")
    ref_tanh = residual_mlp_ref(x, params_f32, gelu="tanh")

    # 1) f32 + exact-erf GELU parity path (resident-weight plan)
    out = jax.block_until_ready(residual_mlp(x, params_f32, gelu="exact"))
    assert out.shape == (B, INPUT_SIZE)
    assert jnp.allclose(out, ref_exact, atol=1e-4, rtol=1e-4), "f32/exact mismatch vs reference"

    # 2) default fast path: bf16 MXU operands + tanh GELU (f32 accumulation / LayerNorm)
    out_fast = jax.block_until_ready(residual_mlp(x, params_bf16))
    assert out_fast.shape == (B, INPUT_SIZE)
    assert jnp.allclose(out_fast, ref_tanh, atol=4e-2, rtol=4e-2), "bf16 mismatch vs reference"

    # 3) hidden-dim-tiled fallback plan (forced at small shape: tc=128 -> 2 hidden chunks)
    out_tiled = jax.block_until_ready(
        residual_mlp(x, params_f32, gelu="exact", force_tiled=True, tile_h=128))
    assert out_tiled.shape == (B, INPUT_SIZE)
    assert jnp.allclose(out_tiled, ref_exact, atol=1e-3, rtol=1e-3), "tiled-plan mismatch"

    print("KERNEL_OK")
</pallas_src>

<mosaic_0001>
module attributes {stable_mosaic.version = 11 : i64} {
  func.func @_resident_kernel(%arg0: i32, %arg1: memref<8x128xf32, #tpu.memory_space<vmem>>, %arg2: memref<128x256xf32, #tpu.memory_space<vmem>>, %arg3: memref<3x256xf32, #tpu.memory_space<vmem>>, %arg4: memref<256x128xf32, #tpu.memory_space<vmem>>, %arg5: memref<3x128xf32, #tpu.memory_space<vmem>>, %arg6: memref<8x128xf32, #tpu.memory_space<vmem>>) attributes {dimension_semantics = [#tpu.dimension_semantics<parallel>], iteration_bounds = array<i64: 1>, scalar_prefetch = 0 : i64, scratch_operands = 0 : i64, tpu.core_type = #tpu.core_type<tc>, window_params = [{transform_indices = @transform_0, window_bounds = array<i64: 8, 128>}, {pipeline_mode = #tpu.pipeline_mode<synchronous>, transform_indices = @transform_1, window_bounds = array<i64: 128, 256>}, {pipeline_mode = #tpu.pipeline_mode<synchronous>, transform_indices = @transform_2, window_bounds = array<i64: 3, 256>}, {pipeline_mode = #tpu.pipeline_mode<synchronous>, transform_indices = @transform_3, window_bounds = array<i64: 256, 128>}, {pipeline_mode = #tpu.pipeline_mode<synchronous>, transform_indices = @transform_4, window_bounds = array<i64: 3, 128>}, {transform_indices = @transform_5, window_bounds = array<i64: 8, 128>}]} {
    %c0 = arith.constant 0 : index
    %c0_0 = arith.constant 0 : index
    %0 = vector.load %arg1[%c0, %c0_0] : memref<8x128xf32, #tpu.memory_space<vmem>>, vector<8x128xf32>
    %c0_1 = arith.constant 0 : index
    %c0_2 = arith.constant 0 : index
    %1 = vector.load %arg3[%c0_1, %c0_2] : memref<3x256xf32, #tpu.memory_space<vmem>>, vector<3x256xf32>
    %c0_3 = arith.constant 0 : index
    %c0_4 = arith.constant 0 : index
    %2 = vector.load %arg5[%c0_3, %c0_4] : memref<3x128xf32, #tpu.memory_space<vmem>>, vector<3x128xf32>
    %c0_5 = arith.constant 0 : index
    %c0_6 = arith.constant 0 : index
    %3 = vector.load %arg2[%c0_5, %c0_6] : memref<128x256xf32, #tpu.memory_space<vmem>>, vector<128x256xf32>
    %cst = arith.constant dense<0.000000e+00> : vector<8x256xf32>
    %4 = tpu.matmul %0, %3, %cst {dimension_numbers = #tpu.dot_dimension_numbers<[1], [0], [0], [1], [0, 0, 1, 1], [], []>} : vector<8x128xf32>, vector<128x256xf32>, vector<8x256xf32> -> vector<8x256xf32>
    %5 = vector.extract_strided_slice %1 {offsets = [0, 0], sizes = [1, 256], strides = [1, 1]} : vector<3x256xf32> to vector<1x256xf32>
    %6 = vector.broadcast %5 : vector<1x256xf32> to vector<8x256xf32>
    %7 = arith.addf %4, %6 : vector<8x256xf32>
    %8 = vector.extract_strided_slice %1 {offsets = [1, 0], sizes = [1, 256], strides = [1, 1]} : vector<3x256xf32> to vector<1x256xf32>
    %9 = vector.extract_strided_slice %1 {offsets = [2, 0], sizes = [1, 256], strides = [1, 1]} : vector<3x256xf32> to vector<1x256xf32>
    %cst_7 = arith.constant dense<0.000000e+00> : vector<8xf32>
    %10 = vector.multi_reduction <add>, %7, %cst_7 [1] : vector<8x256xf32> to vector<8xf32>
    %11 = vector.shape_cast %10 : vector<8xf32> to vector<8x1xf32>
    %cst_8 = arith.constant 2.560000e+02 : f32
    %12 = vector.broadcast %cst_8 : f32 to vector<8x1xf32>
    %13 = arith.divf %11, %12 : vector<8x1xf32>
    %14 = vector.broadcast %13 : vector<8x1xf32> to vector<8x256xf32>
    %15 = arith.subf %7, %14 : vector<8x256xf32>
    %16 = arith.mulf %15, %15 : vector<8x256xf32>
    %cst_9 = arith.constant dense<0.000000e+00> : vector<8xf32>
    %17 = vector.multi_reduction <add>, %16, %cst_9 [1] : vector<8x256xf32> to vector<8xf32>
    %18 = vector.shape_cast %17 : vector<8xf32> to vector<8x1xf32>
    %cst_10 = arith.constant 2.560000e+02 : f32
    %19 = vector.broadcast %cst_10 : f32 to vector<8x1xf32>
    %20 = arith.divf %18, %19 : vector<8x1xf32>
    %cst_11 = arith.constant 9.99999974E-6 : f32
    %21 = vector.broadcast %cst_11 : f32 to vector<8x1xf32>
    %22 = arith.addf %20, %21 : vector<8x1xf32>
    %23 = math.rsqrt %22 : vector<8x1xf32>
    %24 = vector.broadcast %23 : vector<8x1xf32> to vector<8x256xf32>
    %25 = arith.mulf %15, %24 : vector<8x256xf32>
    %26 = vector.broadcast %8 : vector<1x256xf32> to vector<8x256xf32>
    %27 = arith.mulf %25, %26 : vector<8x256xf32>
    %28 = vector.broadcast %9 : vector<1x256xf32> to vector<8x256xf32>
    %29 = arith.addf %27, %28 : vector<8x256xf32>
    %cst_12 = arith.constant 5.000000e-01 : f32
    %30 = vector.broadcast %cst_12 : f32 to vector<8x256xf32>
    %31 = arith.mulf %30, %29 : vector<8x256xf32>
    %cst_13 = arith.constant 0.707106769 : f32
    %32 = vector.broadcast %cst_13 : f32 to vector<8x256xf32>
    %33 = arith.mulf %29, %32 : vector<8x256xf32>
    %34 = math.erf %33 : vector<8x256xf32>
    %cst_14 = arith.constant 1.000000e+00 : f32
    %35 = vector.broadcast %cst_14 : f32 to vector<8x256xf32>
    %36 = arith.addf %35, %34 : vector<8x256xf32>
    %37 = arith.mulf %31, %36 : vector<8x256xf32>
    %c0_15 = arith.constant 0 : index
    %c0_16 = arith.constant 0 : index
    %38 = vector.load %arg4[%c0_15, %c0_16] : memref<256x128xf32, #tpu.memory_space<vmem>>, vector<256x128xf32>
    %cst_17 = arith.constant dense<0.000000e+00> : vector<8x128xf32>
    %39 = tpu.matmul %37, %38, %cst_17 {dimension_numbers = #tpu.dot_dimension_numbers<[1], [0], [0], [1], [0, 0, 1, 1], [], []>} : vector<8x256xf32>, vector<256x128xf32>, vector<8x128xf32> -> vector<8x128xf32>
    %40 = vector.extract_strided_slice %2 {offsets = [0, 0], sizes = [1, 128], strides = [1, 1]} : vector<3x128xf32> to vector<1x128xf32>
    %41 = vector.broadcast %40 : vector<1x128xf32> to vector<8x128xf32>
    %42 = arith.addf %39, %41 : vector<8x128xf32>
    %43 = arith.addf %42, %0 : vector<8x128xf32>
    %44 = vector.extract_strided_slice %2 {offsets = [1, 0], sizes = [1, 128], strides = [1, 1]} : vector<3x128xf32> to vector<1x128xf32>
    %45 = vector.extract_strided_slice %2 {offsets = [2, 0], sizes = [1, 128], strides = [1, 1]} : vector<3x128xf32> to vector<1x128xf32>
    %cst_18 = arith.constant dense<0.000000e+00> : vector<8xf32>
    %46 = vector.multi_reduction <add>, %43, %cst_18 [1] : vector<8x128xf32> to vector<8xf32>
    %47 = vector.shape_cast %46 : vector<8xf32> to vector<8x1xf32>
    %cst_19 = arith.constant 1.280000e+02 : f32
    %48 = vector.broadcast %cst_19 : f32 to vector<8x1xf32>
    %49 = arith.divf %47, %48 : vector<8x1xf32>
    %50 = vector.broadcast %49 : vector<8x1xf32> to vector<8x128xf32>
    %51 = arith.subf %43, %50 : vector<8x128xf32>
    %52 = arith.mulf %51, %51 : vector<8x128xf32>
    %cst_20 = arith.constant dense<0.000000e+00> : vector<8xf32>
    %53 = vector.multi_reduction <add>, %52, %cst_20 [1] : vector<8x128xf32> to vector<8xf32>
    %54 = vector.shape_cast %53 : vector<8xf32> to vector<8x1xf32>
    %cst_21 = arith.constant 1.280000e+02 : f32
    %55 = vector.broadcast %cst_21 : f32 to vector<8x1xf32>
    %56 = arith.divf %54, %55 : vector<8x1xf32>
    %cst_22 = arith.constant 9.99999974E-6 : f32
    %57 = vector.broadcast %cst_22 : f32 to vector<8x1xf32>
    %58 = arith.addf %56, %57 : vector<8x1xf32>
    %59 = math.rsqrt %58 : vector<8x1xf32>
    %60 = vector.broadcast %59 : vector<8x1xf32> to vector<8x128xf32>
    %61 = arith.mulf %51, %60 : vector<8x128xf32>
    %62 = vector.broadcast %44 : vector<1x128xf32> to vector<8x128xf32>
    %63 = arith.mulf %61, %62 : vector<8x128xf32>
    %64 = vector.broadcast %45 : vector<1x128xf32> to vector<8x128xf32>
    %65 = arith.addf %63, %64 : vector<8x128xf32>
    %c0_23 = arith.constant 0 : index
    %c0_24 = arith.constant 0 : index
    %66 = vector.load %arg6[%c0_23, %c0_24] : memref<8x128xf32, #tpu.memory_space<vmem>>, vector<8x128xf32>
    tpu.vector_store %arg6[%c0_23, %c0_24], %65 {strides = array<i32>} : memref<8x128xf32, #tpu.memory_space<vmem>>, vector<8x128xf32>,
    return
  }
  func.func @transform_0(%arg0: i32) -> (i32, i32) {
    %c0_i32 = arith.constant 0 : i32
    %c0_i32_0 = arith.constant 0 : i32
    return %arg0, %c0_i32 : i32, i32
  }
  func.func @transform_1(%arg0: i32) -> (i32, i32) {
    %c0_i32 = arith.constant 0 : i32
    %c0_i32_0 = arith.constant 0 : i32
    %c0_i32_1 = arith.constant 0 : i32
    return %c0_i32, %c0_i32_0 : i32, i32
  }
  func.func @transform_2(%arg0: i32) -> (i32, i32) {
    %c0_i32 = arith.constant 0 : i32
    %c0_i32_0 = arith.constant 0 : i32
    %c0_i32_1 = arith.constant 0 : i32
    return %c0_i32, %c0_i32_0 : i32, i32
  }
  func.func @transform_3(%arg0: i32) -> (i32, i32) {
    %c0_i32 = arith.constant 0 : i32
    %c0_i32_0 = arith.constant 0 : i32
    %c0_i32_1 = arith.constant 0 : i32
    return %c0_i32, %c0_i32_0 : i32, i32
  }
  func.func @transform_4(%arg0: i32) -> (i32, i32) {
    %c0_i32 = arith.constant 0 : i32
    %c0_i32_0 = arith.constant 0 : i32
    %c0_i32_1 = arith.constant 0 : i32
    return %c0_i32, %c0_i32_0 : i32, i32
  }
  func.func @transform_5(%arg0: i32) -> (i32, i32) {
    %c0_i32 = arith.constant 0 : i32
    %c0_i32_0 = arith.constant 0 : i32
    return %arg0, %c0_i32 : i32, i32
  }
}

module attributes {stable_mosaic.version = 11 : i64} {
  func.func @_resident_kernel(%arg0: i32, %arg1: memref<8x128xf32, #tpu.memory_space<vmem>>, %arg2: memref<128x256xf32, #tpu.memory_space<vmem>>, %arg3: memref<3x256xf32, #tpu.memory_space<vmem>>, %arg4: memref<256x128xf32, #tpu.memory_space<vmem>>, %arg5: memref<3x128xf32, #tpu.memory_space<vmem>>, %arg6: memref<8x128xf32, #tpu.memory_space<vmem>>) attributes {dimension_semantics = [#tpu.dimension_semantics<parallel>], iteration_bounds = array<i64: 1>, scalar_prefetch = 0 : i64, scratch_operands = 0 : i64, tpu.core_type = #tpu.core_type<tc>, window_params = [{transform_indices = @transform_0, window_bounds = array<i64: 8, 128>}, {pipeline_mode = #tpu.pipeline_mode<synchronous>, transform_indices = @transform_1, window_bounds = array<i64: 128, 256>}, {pipeline_mode = #tpu.pipeline_mode<synchronous>, transform_indices = @transform_2, window_bounds = array<i64: 3, 256>}, {pipeline_mode = #tpu.pipeline_mode<synchronous>, transform_indices = @transform_3, window_bounds = array<i64: 256, 128>}, {pipeline_mode = #tpu.pipeline_mode<synchronous>, transform_indices = @transform_4, window_bounds = array<i64: 3, 128>}, {transform_indices = @transform_5, window_bounds = array<i64: 8, 128>}]} {
    %c0 = arith.constant 0 : index
    %c0_0 = arith.constant 0 : index
    %0 = vector.load %arg1[%c0, %c0_0] : memref<8x128xf32, #tpu.memory_space<vmem>>, vector<8x128xf32>
    %c0_1 = arith.constant 0 : index
    %c0_2 = arith.constant 0 : index
    %1 = vector.load %arg3[%c0_1, %c0_2] : memref<3x256xf32, #tpu.memory_space<vmem>>, vector<3x256xf32>
    %c0_3 = arith.constant 0 : index
    %c0_4 = arith.constant 0 : index
    %2 = vector.load %arg5[%c0_3, %c0_4] : memref<3x128xf32, #tpu.memory_space<vmem>>, vector<3x128xf32>
    %c0_5 = arith.constant 0 : index
    %c0_6 = arith.constant 0 : index
    %3 = vector.load %arg2[%c0_5, %c0_6] : memref<128x256xf32, #tpu.memory_space<vmem>>, vector<128x256xf32>
    %cst = arith.constant dense<0.000000e+00> : vector<8x256xf32>
    %4 = tpu.matmul %0, %3, %cst {dimension_numbers = #tpu.dot_dimension_numbers<[1], [0], [0], [1], [0, 0, 1, 1], [], []>} : vector<8x128xf32>, vector<128x256xf32>, vector<8x256xf32> -> vector<8x256xf32>
    %5 = vector.extract_strided_slice %1 {offsets = [0, 0], sizes = [1, 256], strides = [1, 1]} : vector<3x256xf32> to vector<1x256xf32>
    %6 = vector.broadcast %5 : vector<1x256xf32> to vector<8x256xf32>
    %7 = arith.addf %4, %6 : vector<8x256xf32>
    %8 = vector.extract_strided_slice %1 {offsets = [1, 0], sizes = [1, 256], strides = [1, 1]} : vector<3x256xf32> to vector<1x256xf32>
    %9 = vector.extract_strided_slice %1 {offsets = [2, 0], sizes = [1, 256], strides = [1, 1]} : vector<3x256xf32> to vector<1x256xf32>
    %cst_7 = arith.constant dense<0.000000e+00> : vector<8xf32>
    %10 = vector.multi_reduction <add>, %7, %cst_7 [1] : vector<8x256xf32> to vector<8xf32>
    %11 = vector.shape_cast %10 : vector<8xf32> to vector<8x1xf32>
    %cst_8 = arith.constant 2.560000e+02 : f32
    %12 = vector.broadcast %cst_8 : f32 to vector<8x1xf32>
    %13 = arith.divf %11, %12 : vector<8x1xf32>
    %14 = vector.broadcast %13 : vector<8x1xf32> to vector<8x256xf32>
    %15 = arith.subf %7, %14 : vector<8x256xf32>
    %16 = arith.mulf %15, %15 : vector<8x256xf32>
    %cst_9 = arith.constant dense<0.000000e+00> : vector<8xf32>
    %17 = vector.multi_reduction <add>, %16, %cst_9 [1] : vector<8x256xf32> to vector<8xf32>
    %18 = vector.shape_cast %17 : vector<8xf32> to vector<8x1xf32>
    %cst_10 = arith.constant 2.560000e+02 : f32
    %19 = vector.broadcast %cst_10 : f32 to vector<8x1xf32>
    %20 = arith.divf %18, %19 : vector<8x1xf32>
    %cst_11 = arith.constant 9.99999974E-6 : f32
    %21 = vector.broadcast %cst_11 : f32 to vector<8x1xf32>
    %22 = arith.addf %20, %21 : vector<8x1xf32>
    %23 = math.rsqrt %22 : vector<8x1xf32>
    %24 = vector.broadcast %23 : vector<8x1xf32> to vector<8x256xf32>
    %25 = arith.mulf %15, %24 : vector<8x256xf32>
    %26 = vector.broadcast %8 : vector<1x256xf32> to vector<8x256xf32>
    %27 = arith.mulf %25, %26 : vector<8x256xf32>
    %28 = vector.broadcast %9 : vector<1x256xf32> to vector<8x256xf32>
    %29 = arith.addf %27, %28 : vector<8x256xf32>
    %cst_12 = arith.constant 5.000000e-01 : f32
    %30 = vector.broadcast %cst_12 : f32 to vector<8x256xf32>
    %31 = arith.mulf %30, %29 : vector<8x256xf32>
    %cst_13 = arith.constant 0.707106769 : f32
    %32 = vector.broadcast %cst_13 : f32 to vector<8x256xf32>
    %33 = arith.mulf %29, %32 : vector<8x256xf32>
    %34 = math.erf %33 : vector<8x256xf32>
    %cst_14 = arith.constant 1.000000e+00 : f32
    %35 = vector.broadcast %cst_14 : f32 to vector<8x256xf32>
    %36 = arith.addf %35, %34 : vector<8x256xf32>
    %37 = arith.mulf %31, %36 : vector<8x256xf32>
    %c0_15 = arith.constant 0 : index
    %c0_16 = arith.constant 0 : index
    %38 = vector.load %arg4[%c0_15, %c0_16] : memref<256x128xf32, #tpu.memory_space<vmem>>, vector<256x128xf32>
    %cst_17 = arith.constant dense<0.000000e+00> : vector<8x128xf32>
    %39 = tpu.matmul %37, %38, %cst_17 {dimension_numbers = #tpu.dot_dimension_numbers<[1], [0], [0], [1], [0, 0, 1, 1], [], []>} : vector<8x256xf32>, vector<256x128xf32>, vector<8x128xf32> -> vector<8x128xf32>
    %40 = vector.extract_strided_slice %2 {offsets = [0, 0], sizes = [1, 128], strides = [1, 1]} : vector<3x128xf32> to vector<1x128xf32>
    %41 = vector.broadcast %40 : vector<1x128xf32> to vector<8x128xf32>
    %42 = arith.addf %39, %41 : vector<8x128xf32>
    %43 = arith.addf %42, %0 : vector<8x128xf32>
    %44 = vector.extract_strided_slice %2 {offsets = [1, 0], sizes = [1, 128], strides = [1, 1]} : vector<3x128xf32> to vector<1x128xf32>
    %45 = vector.extract_strided_slice %2 {offsets = [2, 0], sizes = [1, 128], strides = [1, 1]} : vector<3x128xf32> to vector<1x128xf32>
    %cst_18 = arith.constant dense<0.000000e+00> : vector<8xf32>
    %46 = vector.multi_reduction <add>, %43, %cst_18 [1] : vector<8x128xf32> to vector<8xf32>
    %47 = vector.shape_cast %46 : vector<8xf32> to vector<8x1xf32>
    %cst_19 = arith.constant 1.280000e+02 : f32
    %48 = vector.broadcast %cst_19 : f32 to vector<8x1xf32>
    %49 = arith.divf %47, %48 : vector<8x1xf32>
    %50 = vector.broadcast %49 : vector<8x1xf32> to vector<8x128xf32>
    %51 = arith.subf %43, %50 : vector<8x128xf32>
    %52 = arith.mulf %51, %51 : vector<8x128xf32>
    %cst_20 = arith.constant dense<0.000000e+00> : vector<8xf32>
    %53 = vector.multi_reduction <add>, %52, %cst_20 [1] : vector<8x128xf32> to vector<8xf32>
    %54 = vector.shape_cast %53 : vector<8xf32> to vector<8x1xf32>
    %cst_21 = arith.constant 1.280000e+02 : f32
    %55 = vector.broadcast %cst_21 : f32 to vector<8x1xf32>
    %56 = arith.divf %54, %55 : vector<8x1xf32>
    %cst_22 = arith.constant 9.99999974E-6 : f32
    %57 = vector.broadcast %cst_22 : f32 to vector<8x1xf32>
    %58 = arith.addf %56, %57 : vector<8x1xf32>
    %59 = math.rsqrt %58 : vector<8x1xf32>
    %60 = vector.broadcast %59 : vector<8x1xf32> to vector<8x128xf32>
    %61 = arith.mulf %51, %60 : vector<8x128xf32>
    %62 = vector.broadcast %44 : vector<1x128xf32> to vector<8x128xf32>
    %63 = arith.mulf %61, %62 : vector<8x128xf32>
    %64 = vector.broadcast %45 : vector<1x128xf32> to vector<8x128xf32>
    %65 = arith.addf %63, %64 : vector<8x128xf32>
    %c0_23 = arith.constant 0 : index
    %c0_24 = arith.constant 0 : index
    %66 = vector.load %arg6[%c0_23, %c0_24] : memref<8x128xf32, #tpu.memory_space<vmem>>, vector<8x128xf32>
    tpu.vector_store %arg6[%c0_23, %c0_24], %65 {strides = array<i32>} : memref<8x128xf32, #tpu.memory_space<vmem>>, vector<8x128xf32>,
    return
  }
  func.func @transform_0(%arg0: i32) -> (i32, i32) {
    %c0_i32 = arith.constant 0 : i32
    %c0_i32_0 = arith.constant 0 : i32
    return %arg0, %c0_i32 : i32, i32
  }
  func.func @transform_1(%arg0: i32) -> (i32, i32) {
    %c0_i32 = arith.constant 0 : i32
    %c0_i32_0 = arith.constant 0 : i32
    %c0_i32_1 = arith.constant 0 : i32
    return %c0_i32, %c0_i32_0 : i32, i32
  }
  func.func @transform_2(%arg0: i32) -> (i32, i32) {
    %c0_i32 = arith.constant 0 : i32
    %c0_i32_0 = arith.constant 0 : i32
    %c0_i32_1 = arith.constant 0 : i32
    return %c0_i32, %c0_i32_0 : i32, i32
  }
  func.func @transform_3(%arg0: i32) -> (i32, i32) {
    %c0_i32 = arith.constant 0 : i32
    %c0_i32_0 = arith.constant 0 : i32
    %c0_i32_1 = arith.constant 0 : i32
    return %c0_i32, %c0_i32_0 : i32, i32
  }
  func.func @transform_4(%arg0: i32) -> (i32, i32) {
    %c0_i32 = arith.constant 0 : i32
    %c0_i32_0 = arith.constant 0 : i32
    %c0_i32_1 = arith.constant 0 : i32
    return %c0_i32, %c0_i32_0 : i32, i32
  }
  func.func @transform_5(%arg0: i32) -> (i32, i32) {
    %c0_i32 = arith.constant 0 : i32
    %c0_i32_0 = arith.constant 0 : i32
    return %arg0, %c0_i32 : i32, i32
  }
}

</mosaic_0001>

<llo_original>
// kernel: _residual_mlp.1
$region0: #{_residual_mlp.1}
  #allocation0 [shape = 'u32[]', space=smem, size = 0x4, offset = 0x4, fixed_abs, tag = 'smem constant byte address 0x4 - core index']
  #allocation1 [shape = 'u32[72,128]{1,0:T(1,128)}', space=vmem, size = 0x9000, scoped, tag = 'internal scratch']
  %s0 = inlined_call_operand.vmem [shape: f32[8,128], index: 0, kind: input, shape index: {}]
  %s1 = inlined_call_operand.hbm [shape: f32[128,256], index: 1, kind: input, shape index: {}]
  %s2 = inlined_call_operand.vmem [shape: f32[3,256], index: 2, kind: input, shape index: {}]
  %s3 = inlined_call_operand.hbm [shape: f32[256,128], index: 3, kind: input, shape index: {}]
  %s4 = inlined_call_operand.vmem [shape: f32[3,128], index: 4, kind: input, shape index: {}]
  %s5 = inlined_call_operand.hbm [shape: f32[8,128], index: 5, kind: output, shape index: {}]
  %s6 = sld [smem:[#allocation0]]
  $region38: #{_residual_mlp.1} parent=0
    _
  %s8 = ssub.s32 1, %s6
  %s9 = scalar_select 0, %s8, %s6
  $region1: #{_residual_mlp.1} parent=0
    #allocation2 [shape = 'u8[131072]{0}', space=vmem, size = 0x20000, scoped, tag = 'input window, operand 1, single buffered']
    #allocation3 [shape = 's32[1]{0}', space=sflag, size = 0x4, scoped, tag = 'scoped memory for _residual_mlp.1']
    #allocation4 [shape = 's32[1]{0}', space=sflag, size = 0x4, scoped, tag = 'scoped memory for _residual_mlp.1']
    #allocation5 [shape = 'u8[131072]{0}', space=vmem, size = 0x20000, scoped, tag = 'input window, operand 3, single buffered']
    #allocation6 [shape = 's32[1]{0}', space=sflag, size = 0x4, scoped, tag = 'scoped memory for _residual_mlp.1']
    #allocation7 [shape = 'u8[4096]{0}', space=vmem, size = 0x1000, scoped, tag = 'output window, operand 0, single buffered']
    %10 = vsyncpa [#allocation3], 0
    %11 = vsyncpa [#allocation6], 0
    %12 = vsyncpa [#allocation4], 0
    // Predicated region
    $region2: #{_residual_mlp.1} parent=1 // pred_check
      _
    $region3: #{_residual_mlp.1} parent=1 // pred_check_branch
      %14 = sbr.rel (0) target = $region5
    $region4: #{_residual_mlp.1} parent=1 // pred_region
      _
    $region5: #{_residual_mlp.1} parent=1 // pred_fallthru
      _
    // Predicated region
    $region6: #{_residual_mlp.1} parent=1 // pred_check
      _
    $region7: #{_residual_mlp.1} parent=1 // pred_check_branch
      %16 = sbr.rel (0) target = $region9
    $region8: #{_residual_mlp.1} parent=1 // pred_region
      %18 = vsyncadd [#allocation3], 0
      %s19 = sshll.u32 %s1, 4
      %s20 = int_to_ptr.hbm [resolvable:$true] %s19
      %s21 = sshll.u32 [#allocation2], 4
      %s22 = int_to_ptr.vmem [resolvable:$true] %s21
      %27 = dma.hbm_to_vmem [thread:$0]  %s20, 4096, %s22, [#allocation3], 256, 256, 16
    $region9: #{_residual_mlp.1} parent=1 // pred_fallthru
      _
    // Predicated region
    $region10: #{_residual_mlp.1} parent=1 // pred_check
      _
    $region11: #{_residual_mlp.1} parent=1 // pred_check_branch
      %29 = sbr.rel (0) target = $region13
    $region12: #{_residual_mlp.1} parent=1 // pred_region
      _
    $region13: #{_residual_mlp.1} parent=1 // pred_fallthru
      _
    // Predicated region
    $region14: #{_residual_mlp.1} parent=1 // pred_check
      _
    $region15: #{_residual_mlp.1} parent=1 // pred_check_branch
      %31 = sbr.rel (0) target = $region17
    $region16: #{_residual_mlp.1} parent=1 // pred_region
      %33 = vsyncadd [#allocation6], 0
      %s34 = sshll.u32 %s3, 4
      %s35 = int_to_ptr.hbm [resolvable:$true] %s34
      %s36 = sshll.u32 [#allocation5], 4
      %s37 = int_to_ptr.vmem [resolvable:$true] %s36
      %42 = dma.hbm_to_vmem [thread:$0]  %s35, 4096, %s37, [#allocation6], 128, 128, 8
    $region17: #{_residual_mlp.1} parent=1 // pred_fallthru
      _
    // Predicated region
    $region18: #{_residual_mlp.1} parent=1 // pred_check
      _
    $region19: #{_residual_mlp.1} parent=1 // pred_check_branch
      %44 = sbr.rel (0) target = $region21
    $region20: #{_residual_mlp.1} parent=1 // pred_region
      _
    $region21: #{_residual_mlp.1} parent=1 // pred_fallthru
      _
    // Predicated region
    $region22: #{_residual_mlp.1} parent=1 // pred_check
      _
    $region23: #{_residual_mlp.1} parent=1 // pred_check_branch
      %46 = sbr.rel (0) target = $region25
    $region24: #{_residual_mlp.1} parent=1 // pred_region
      %48 = dma.done [#allocation3], 4096
    $region25: #{_residual_mlp.1} parent=1 // pred_fallthru
      _
    // Predicated region
    $region26: #{_residual_mlp.1} parent=1 // pred_check
      _
    $region27: #{_residual_mlp.1} parent=1 // pred_check_branch
      %50 = sbr.rel (0) target = $region29
    $region28: #{_residual_mlp.1} parent=1 // pred_region
      %52 = dma.done [#allocation6], 4096
    $region29: #{_residual_mlp.1} parent=1 // pred_fallthru
      _
    %v53 = vld [vmem:[%s0] sm:$0xff]
    %v54 = vld [vmem:[%s2] sm:$0x77]
    %v55 = vld [vmem:[%s4] sm:$0x7]
    %v56 = vld [vmem:[#allocation2] sm:$0xff]
    %v57 = vld [vmem:[#allocation2 + $0x8] sm:$0xff]
    %v58 = vld [vmem:[#allocation2 + $0x10] sm:$0xff]
    %v59 = vld [vmem:[#allocation2 + $0x18] sm:$0xff]
    %v60 = vld [vmem:[#allocation2 + $0x20] sm:$0xff]
    %v61 = vld [vmem:[#allocation2 + $0x28] sm:$0xff]
    %v62 = vld [vmem:[#allocation2 + $0x30] sm:$0xff]
    %v63 = vld [vmem:[#allocation2 + $0x38] sm:$0xff]
    %v64 = vld [vmem:[#allocation2 + $0x40] sm:$0xff]
    %v65 = vld [vmem:[#allocation2 + $0x48] sm:$0xff]
    %v66 = vld [vmem:[#allocation2 + $0x50] sm:$0xff]
    %v67 = vld [vmem:[#allocation2 + $0x58] sm:$0xff]
    %v68 = vld [vmem:[#allocation2 + $0x60] sm:$0xff]
    %v69 = vld [vmem:[#allocation2 + $0x68] sm:$0xff]
    %v70 = vld [vmem:[#allocation2 + $0x70] sm:$0xff]
    %v71 = vld [vmem:[#allocation2 + $0x78] sm:$0xff]
    %v72 = vld [vmem:[#allocation2 + $0x80] sm:$0xff]
    %v73 = vld [vmem:[#allocation2 + $0x88] sm:$0xff]
    %v74 = vld [vmem:[#allocation2 + $0x90] sm:$0xff]
    %v75 = vld [vmem:[#allocation2 + $0x98] sm:$0xff]
    %v76 = vld [vmem:[#allocation2 + $0xa0] sm:$0xff]
    %v77 = vld [vmem:[#allocation2 + $0xa8] sm:$0xff]
    %v78 = vld [vmem:[#allocation2 + $0xb0] sm:$0xff]
    %v79 = vld [vmem:[#allocation2 + $0xb8] sm:$0xff]
    %v80 = vld [vmem:[#allocation2 + $0xc0] sm:$0xff]
    %v81 = vld [vmem:[#allocation2 + $0xc8] sm:$0xff]
    %v82 = vld [vmem:[#allocation2 + $0xd0] sm:$0xff]
    %v83 = vld [vmem:[#allocation2 + $0xd8] sm:$0xff]
    %v84 = vld [vmem:[#allocation2 + $0xe0] sm:$0xff]
    %v85 = vld [vmem:[#allocation2 + $0xe8] sm:$0xff]
    %v86 = vld [vmem:[#allocation2 + $0xf0] sm:$0xff]
    %v87 = vld [vmem:[#allocation2 + $0xf8] sm:$0xff]
    %v89 = vperm.slane %v54, 0
    %v90 = vperm.slane %v54, 4
    %v93 = vperm.slane %v89, 0
    %v94 = vperm.slane %v90, 0
    %95 = vmatpush.msra.mxu0 %v86
    %96 = vmatpush.msra.mxu0 %v84
    %97 = vmatpush.msra.mxu0 %v82
    %98 = vmatpush.msra.mxu0 %v80
    %99 = vmatpush.msra.mxu0 %v78
    %100 = vmatpush.msra.mxu0 %v76
    %101 = vmatpush.msra.mxu0 %v74
    %102 = vmatpush.msra.mxu0 %v72
    %103 = vmatpush.msra.mxu0 %v70
    %104 = vmatpush.msra.mxu0 %v68
    %105 = vmatpush.msra.mxu0 %v66
    %106 = vmatpush.msra.mxu0 %v64
    %107 = vmatpush.msra.mxu0 %v62
    %108 = vmatpush.msra.mxu0 %v60
    %109 = vmatpush.msra.mxu0 %v58
    %110 = vmatpush.msra.mxu0 %v56
    %111 = vmatmul.f32.gmra.mxu0 %v53
    %v112 = vpop.f32.mrf.mxu0
    %v113 = vadd.f32 %v93, %v112
    %114 = vdwg.mxu0
    %115 = vmatpush.msra.mxu0 %v87
    %116 = vmatpush.msra.mxu0 %v85
    %117 = vmatpush.msra.mxu0 %v83
    %118 = vmatpush.msra.mxu0 %v81
    %119 = vmatpush.msra.mxu0 %v79
    %120 = vmatpush.msra.mxu0 %v77
    %121 = vmatpush.msra.mxu0 %v75
    %122 = vmatpush.msra.mxu0 %v73
    %123 = vmatpush.msra.mxu0 %v71
    %124 = vmatpush.msra.mxu0 %v69
    %125 = vmatpush.msra.mxu0 %v67
    %126 = vmatpush.msra.mxu0 %v65
    %127 = vmatpush.msra.mxu0 %v63
    %128 = vmatpush.msra.mxu0 %v61
    %129 = vmatpush.msra.mxu0 %v59
    %130 = vmatpush.msra.mxu0 %v57
    %131 = vmatmul.f32.gmra.mxu0 %v53
    %v132 = vpop.f32.mrf.mxu0
    %v133 = vadd.f32 %v94, %v132
    %134 = vdwg.mxu0
    %v135 = vadd.f32 %v113, %v133
    %136 = vadd.xlane.f32.xlu0 %v135
    %v137 = vpop.xlane.xlu0 %136
    %v138 = vrcp.pop 256.0
    %v139 = vmul.f32 256.0, %v138
    %v140 = vsub.f32 1.0, %v139
    %v141 = vmul.f32 %v138, %v140
    %v142 = vadd.f32 %v138, %v141
    %vm143 = vweird.f32 %v138
    %v144 = vsel %vm143, %v138, %v142
    %v145 = vmul.f32 %v137, %v144
    %v146 = vsub.f32 %v113, %v145
    %v147 = vsub.f32 %v133, %v145
    %v148 = vmul.f32 %v146, %v146
    %v149 = vmul.f32 %v147, %v147
    %v150 = vadd.f32 %v148, %v149
    %151 = vadd.xlane.f32.xlu0 %v150
    %v152 = vpop.xlane.xlu0 %151
    %v153 = vmul.f32 %v152, %v144
    %v154 = vadd.f32 %v153, 1e-05
    %v155 = vrsqrt.pop %v154
    %v156 = vmul.f32 %v155, %v154
    %v157 = vmul.f32 %v156, %v155
    %v158 = vmul.f32 0.5, %v157
    %v159 = vsub.f32 1.5, %v158
    %v160 = vmul.f32 %v155, %v159
    %vm161 = vweird.f32 %v154
    %vm162 = vweird.f32 %v155
    %vm163 = vmor %vm161, %vm162
    %v164 = vsel %vm163, %v155, %v160
    %v165 = vmul.f32 %v146, %v164
    %v166 = vmul.f32 %v147, %v164
    %v167 = vperm.slane %v54, 1
    %v168 = vperm.slane %v54, 5
    %v171 = vperm.slane %v167, 1
    %v172 = vperm.slane %v168, 1
    %v173 = vmul.f32 %v165, %v171
    %v174 = vmul.f32 %v166, %v172
    %v175 = vperm.slane %v54, 2
    %v176 = vperm.slane %v54, 6
    %v179 = vperm.slane %v175, 2
    %v180 = vperm.slane %v176, 2
    %v181 = vadd.f32 %v173, %v179
    %v182 = vadd.f32 %v174, %v180
    %v183 = vmul.f32 %v181, 0.5
    %v184 = vmul.f32 %v182, 0.5
    %v185 = vmul.f32 %v181, 0.70710677
    %v186 = vmul.f32 %v182, 0.70710677
    %v187 = vmul.f32 %v185, %v185
    %v188 = vmin.f32 16.0, %v187
    %v189 = vmul.f32 %v188, 2.1237322e-06
    %v190 = vadd.f32 %v189, 0.00028619796
    %v191 = vmul.f32 %v188, %v190
    %v192 = vadd.f32 %v191, 0.0036580483
    %v193 = vmul.f32 %v188, %v192
    %v194 = vadd.f32 %v193, 0.05243302
    %v195 = vmul.f32 %v188, %v194
    %v196 = vadd.f32 %v195, 0.18741608
    %v197 = vmul.f32 %v188, %v196
    %v198 = vadd.f32 %v197, 1.1283791
    %v199 = vmul.f32 %v185, %v198
    %v200 = vmul.f32 %v188, 3.8918573e-05
    %v201 = vadd.f32 %v200, 0.001143296
    %v202 = vmul.f32 %v188, %v201
    %v203 = vadd.f32 %v202, 0.014752088
    %v204 = vmul.f32 %v188, %v203
    %v205 = vadd.f32 %v204, 0.112945676
    %v206 = vmul.f32 %v188, %v205
    %v207 = vadd.f32 %v206, 0.4994258
    %v208 = vmul.f32 %v188, %v207
    %v209 = vadd.f32 %v208, 1.0
    %v210 = vrcp.pop %v209
    %v211 = vmul.f32 %v209, %v210
    %v212 = vsub.f32 1.0, %v211
    %v213 = vmul.f32 %v210, %v212
    %v214 = vadd.f32 %v210, %v213
    %vm215 = vweird.f32 %v209
    %vm216 = vweird.f32 %v210
    %vm217 = vmor %vm215, %vm216
    %v218 = vsel %vm217, %v210, %v214
    %v219 = vand.u32 2147483647, %v209
    %vm220 = vcmp.eq.f32.partialorder %v219, 8.507059e+37
    %v221 = vand.u32 %v209, 2147483648
    %v222 = vor.u32 1.1754944e-38, %v221
    %v223 = vsel %vm220, %v222, %v218
    %v224 = vmul.f32 %v199, %v223
    %v225 = vmin.f32 %v224, 1.0
    %v226 = vmax.f32 %v225, -1.0
    %v227 = vmul.f32 %v186, %v186
    %v228 = vmin.f32 16.0, %v227
    %v229 = vmul.f32 %v228, 2.1237322e-06
    %v230 = vadd.f32 %v229, 0.00028619796
    %v231 = vmul.f32 %v228, %v230
    %v232 = vadd.f32 %v231, 0.0036580483
    %v233 = vmul.f32 %v228, %v232
    %v234 = vadd.f32 %v233, 0.05243302
    %v235 = vmul.f32 %v228, %v234
    %v236 = vadd.f32 %v235, 0.18741608
    %v237 = vmul.f32 %v228, %v236
    %v238 = vadd.f32 %v237, 1.1283791
    %v239 = vmul.f32 %v186, %v238
    %v240 = vmul.f32 %v228, 3.8918573e-05
    %v241 = vadd.f32 %v240, 0.001143296
    %v242 = vmul.f32 %v228, %v241
    %v243 = vadd.f32 %v242, 0.014752088
    %v244 = vmul.f32 %v228, %v243
    %v245 = vadd.f32 %v244, 0.112945676
    %v246 = vmul.f32 %v228, %v245
    %v247 = vadd.f32 %v246, 0.4994258
    %v248 = vmul.f32 %v228, %v247
    %v249 = vadd.f32 %v248, 1.0
    %v250 = vrcp.pop %v249
    %v251 = vmul.f32 %v249, %v250
    %v252 = vsub.f32 1.0, %v251
    %v253 = vmul.f32 %v250, %v252
    %v254 = vadd.f32 %v250, %v253
    %vm255 = vweird.f32 %v249
    %vm256 = vweird.f32 %v250
    %vm257 = vmor %vm255, %vm256
    %v258 = vsel %vm257, %v250, %v254
    %v259 = vand.u32 2147483647, %v249
    %vm260 = vcmp.eq.f32.partialorder %v259, 8.507059e+37
    %v261 = vand.u32 %v249, 2147483648
    %v262 = vor.u32 1.1754944e-38, %v261
    %v263 = vsel %vm260, %v262, %v258
    %v264 = vmul.f32 %v239, %v263
    %v265 = vmin.f32 %v264, 1.0
    %v266 = vmax.f32 %v265, -1.0
    %v267 = vadd.f32 %v226, 1.0
    %v268 = vadd.f32 %v266, 1.0
    %v269 = vmul.f32 %v183, %v267
    %v270 = vmul.f32 %v184, %v268
    %v271 = vld [vmem:[#allocation5] sm:$0xff]
    %v272 = vld [vmem:[#allocation5 + $0x8] sm:$0xff]
    %v273 = vld [vmem:[#allocation5 + $0x10] sm:$0xff]
    %v274 = vld [vmem:[#allocation5 + $0x18] sm:$0xff]
    %v275 = vld [vmem:[#allocation5 + $0x20] sm:$0xff]
    %v276 = vld [vmem:[#allocation5 + $0x28] sm:$0xff]
    %v277 = vld [vmem:[#allocation5 + $0x30] sm:$0xff]
    %v278 = vld [vmem:[#allocation5 + $0x38] sm:$0xff]
    %v279 = vld [vmem:[#allocation5 + $0x40] sm:$0xff]
    %v280 = vld [vmem:[#allocation5 + $0x48] sm:$0xff]
    %v281 = vld [vmem:[#allocation5 + $0x50] sm:$0xff]
    %v282 = vld [vmem:[#allocation5 + $0x58] sm:$0xff]
    %v283 = vld [vmem:[#allocation5 + $0x60] sm:$0xff]
    %v284 = vld [vmem:[#allocation5 + $0x68] sm:$0xff]
    %v285 = vld [vmem:[#allocation5 + $0x70] sm:$0xff]
    %v286 = vld [vmem:[#allocation5 + $0x78] sm:$0xff]
    %v287 = vld [vmem:[#allocation5 + $0x80] sm:$0xff]
    %v288 = vld [vmem:[#allocation5 + $0x88] sm:$0xff]
    %v289 = vld [vmem:[#allocation5 + $0x90] sm:$0xff]
    %v290 = vld [vmem:[#allocation5 + $0x98] sm:$0xff]
    %v291 = vld [vmem:[#allocation5 + $0xa0] sm:$0xff]
    %v292 = vld [vmem:[#allocation5 + $0xa8] sm:$0xff]
    %v293 = vld [vmem:[#allocation5 + $0xb0] sm:$0xff]
    %v294 = vld [vmem:[#allocation5 + $0xb8] sm:$0xff]
    %v295 = vld [vmem:[#allocation5 + $0xc0] sm:$0xff]
    %v296 = vld [vmem:[#allocation5 + $0xc8] sm:$0xff]
    %v297 = vld [vmem:[#allocation5 + $0xd0] sm:$0xff]
    %v298 = vld [vmem:[#allocation5 + $0xd8] sm:$0xff]
    %v299 = vld [vmem:[#allocation5 + $0xe0] sm:$0xff]
    %v300 = vld [vmem:[#allocation5 + $0xe8] sm:$0xff]
    %v301 = vld [vmem:[#allocation5 + $0xf0] sm:$0xff]
    %v302 = vld [vmem:[#allocation5 + $0xf8] sm:$0xff]
    %v303 = vperm.slane %v55, 0
    %304 = vmatpush.msra.mxu0 %v286
    %305 = vmatpush.msra.mxu0 %v285
    %306 = vmatpush.msra.mxu0 %v284
    %307 = vmatpush.msra.mxu0 %v283
    %308 = vmatpush.msra.mxu0 %v282
    %309 = vmatpush.msra.mxu0 %v281
    %310 = vmatpush.msra.mxu0 %v280
    %311 = vmatpush.msra.mxu0 %v279
    %312 = vmatpush.msra.mxu0 %v278
    %313 = vmatpush.msra.mxu0 %v277
    %314 = vmatpush.msra.mxu0 %v276
    %315 = vmatpush.msra.mxu0 %v275
    %316 = vmatpush.msra.mxu0 %v274
    %317 = vmatpush.msra.mxu0 %v273
    %318 = vmatpush.msra.mxu0 %v272
    %319 = vmatpush.msra.mxu0 %v271
    %320 = vmatmul.f32.gmra.mxu0 %v269
    %v321 = vpop.f32.mrf.mxu0
    %v322 = vadd.f32 %v303, %v321
    %323 = vdwg.mxu0
    %324 = vmatpush.msra.mxu0 %v302
    %325 = vmatpush.msra.mxu0 %v301
    %326 = vmatpush.msra.mxu0 %v300
    %327 = vmatpush.msra.mxu0 %v299
    %328 = vmatpush.msra.mxu0 %v298
    %329 = vmatpush.msra.mxu0 %v297
    %330 = vmatpush.msra.mxu0 %v296
    %331 = vmatpush.msra.mxu0 %v295
    %332 = vmatpush.msra.mxu0 %v294
    %333 = vmatpush.msra.mxu0 %v293
    %334 = vmatpush.msra.mxu0 %v292
    %335 = vmatpush.msra.mxu0 %v291
    %336 = vmatpush.msra.mxu0 %v290
    %337 = vmatpush.msra.mxu0 %v289
    %338 = vmatpush.msra.mxu0 %v288
    %339 = vmatpush.msra.mxu0 %v287
    %340 = vmatmul.f32.gmra.mxu0 %v270
    %v341 = vpop.f32.mrf.mxu0
    %v342 = vadd.f32 %v322, %v341
    %343 = vdwg.mxu0
    %v344 = vadd.f32 %v342, %v53
    %345 = vadd.xlane.f32.xlu0 %v344
    %v346 = vpop.xlane.xlu0 %345
    %v347 = vrcp.pop 128.0
    %v348 = vmul.f32 128.0, %v347
    %v349 = vsub.f32 1.0, %v348
    %v350 = vmul.f32 %v347, %v349
    %v351 = vadd.f32 %v347, %v350
    %vm352 = vweird.f32 %v347
    %v353 = vsel %vm352, %v347, %v351
    %v354 = vmul.f32 %v346, %v353
    %v355 = vsub.f32 %v344, %v354
    %v356 = vmul.f32 %v355, %v355
    %357 = vadd.xlane.f32.xlu0 %v356
    %v358 = vpop.xlane.xlu0 %357
    %v359 = vmul.f32 %v358, %v353
    %v360 = vadd.f32 %v359, 1e-05
    %v361 = vrsqrt.pop %v360
    %v362 = vmul.f32 %v361, %v360
    %v363 = vmul.f32 %v362, %v361
    %v364 = vmul.f32 0.5, %v363
    %v365 = vsub.f32 1.5, %v364
    %v366 = vmul.f32 %v361, %v365
    %vm367 = vweird.f32 %v360
    %vm368 = vweird.f32 %v361
    %vm369 = vmor %vm367, %vm368
    %v370 = vsel %vm369, %v361, %v366
    %v371 = vmul.f32 %v355, %v370
    %v372 = vperm.slane %v55, 1
    %v373 = vmul.f32 %v371, %v372
    %v374 = vperm.slane %v55, 2
    %v375 = vadd.f32 %v373, %v374
    %376 = vst [vmem:[#allocation7] sm:$0xff] %v375
    // Predicated region
    $region30: #{_residual_mlp.1} parent=1 // pred_check
      _
    $region31: #{_residual_mlp.1} parent=1 // pred_check_branch
      %378 = sbr.rel (0) target = $region33
    $region32: #{_residual_mlp.1} parent=1 // pred_region
      %380 = vsyncadd [#allocation4], 0
      %s382 = sshll.u32 [#allocation7], 4
      %s383 = int_to_ptr.vmem [resolvable:$true] %s382
      %s384 = sshll.u32 %s5, 4
      %s385 = int_to_ptr.hbm [resolvable:$true] %s384
      %387 = dma.vmem_to_hbm [thread:$0]  %s383, 128, %s385, [#allocation4]
    $region33: #{_residual_mlp.1} parent=1 // pred_fallthru
      _
    // Predicated region
    $region34: #{_residual_mlp.1} parent=1 // pred_check
      _
    $region35: #{_residual_mlp.1} parent=1 // pred_check_branch
      %389 = sbr.rel (0) target = $region37
    $region36: #{_residual_mlp.1} parent=1 // pred_region
      %391 = dma.done [#allocation4], 128
    $region37: #{_residual_mlp.1} parent=1 // pred_fallthru
      _
    %392 = vsyncpa [#allocation3], 1
    %393 = vsyncpa [#allocation6], 1
    %394 = vsyncpa [#allocation4], 1

// kernel: _residual_mlp.1
$region0: #{_residual_mlp.1}
  #allocation0 [shape = 'u32[]', space=smem, size = 0x4, offset = 0x4, fixed_abs, tag = 'smem constant byte address 0x4 - core index']
  #allocation1 [shape = 'u32[72,128]{1,0:T(1,128)}', space=vmem, size = 0x9000, scoped, tag = 'internal scratch']
  %s0 = inlined_call_operand.vmem [shape: f32[8,128], index: 0, kind: input, shape index: {}]
  %s1 = inlined_call_operand.hbm [shape: f32[128,256], index: 1, kind: input, shape index: {}]
  %s2 = inlined_call_operand.vmem [shape: f32[3,256], index: 2, kind: input, shape index: {}]
  %s3 = inlined_call_operand.hbm [shape: f32[256,128], index: 3, kind: input, shape index: {}]
  %s4 = inlined_call_operand.vmem [shape: f32[3,128], index: 4, kind: input, shape index: {}]
  %s5 = inlined_call_operand.hbm [shape: f32[8,128], index: 5, kind: output, shape index: {}]
  %s6 = sld [smem:[#allocation0]]
  $region38: #{_residual_mlp.1} parent=0
    _
  %s8 = ssub.s32 1, %s6
  %s9 = scalar_select 0, %s8, %s6
  $region1: #{_residual_mlp.1} parent=0
    #allocation2 [shape = 'u8[131072]{0}', space=vmem, size = 0x20000, scoped, tag = 'input window, operand 1, single buffered']
    #allocation3 [shape = 's32[1]{0}', space=sflag, size = 0x4, scoped, tag = 'scoped memory for _residual_mlp.1']
    #allocation4 [shape = 's32[1]{0}', space=sflag, size = 0x4, scoped, tag = 'scoped memory for _residual_mlp.1']
    #allocation5 [shape = 'u8[131072]{0}', space=vmem, size = 0x20000, scoped, tag = 'input window, operand 3, single buffered']
    #allocation6 [shape = 's32[1]{0}', space=sflag, size = 0x4, scoped, tag = 'scoped memory for _residual_mlp.1']
    #allocation7 [shape = 'u8[4096]{0}', space=vmem, size = 0x1000, scoped, tag = 'output window, operand 0, single buffered']
    %10 = vsyncpa [#allocation3], 0
    %11 = vsyncpa [#allocation6], 0
    %12 = vsyncpa [#allocation4], 0
    // Predicated region
    $region2: #{_residual_mlp.1} parent=1 // pred_check
      _
    $region3: #{_residual_mlp.1} parent=1 // pred_check_branch
      %14 = sbr.rel (0) target = $region5
    $region4: #{_residual_mlp.1} parent=1 // pred_region
      _
    $region5: #{_residual_mlp.1} parent=1 // pred_fallthru
      _
    // Predicated region
    $region6: #{_residual_mlp.1} parent=1 // pred_check
      _
    $region7: #{_residual_mlp.1} parent=1 // pred_check_branch
      %16 = sbr.rel (0) target = $region9
    $region8: #{_residual_mlp.1} parent=1 // pred_region
      %18 = vsyncadd [#allocation3], 0
      %s19 = sshll.u32 %s1, 4
      %s20 = int_to_ptr.hbm [resolvable:$true] %s19
      %s21 = sshll.u32 [#allocation2], 4
      %s22 = int_to_ptr.vmem [resolvable:$true] %s21
      %27 = dma.hbm_to_vmem [thread:$0]  %s20, 4096, %s22, [#allocation3], 256, 256, 16
    $region9: #{_residual_mlp.1} parent=1 // pred_fallthru
      _
    // Predicated region
    $region10: #{_residual_mlp.1} parent=1 // pred_check
      _
    $region11: #{_residual_mlp.1} parent=1 // pred_check_branch
      %29 = sbr.rel (0) target = $region13
    $region12: #{_residual_mlp.1} parent=1 // pred_region
      _
    $region13: #{_residual_mlp.1} parent=1 // pred_fallthru
      _
    // Predicated region
    $region14: #{_residual_mlp.1} parent=1 // pred_check
      _
    $region15: #{_residual_mlp.1} parent=1 // pred_check_branch
      %31 = sbr.rel (0) target = $region17
    $region16: #{_residual_mlp.1} parent=1 // pred_region
      %33 = vsyncadd [#allocation6], 0
      %s34 = sshll.u32 %s3, 4
      %s35 = int_to_ptr.hbm [resolvable:$true] %s34
      %s36 = sshll.u32 [#allocation5], 4
      %s37 = int_to_ptr.vmem [resolvable:$true] %s36
      %42 = dma.hbm_to_vmem [thread:$0]  %s35, 4096, %s37, [#allocation6], 128, 128, 8
    $region17: #{_residual_mlp.1} parent=1 // pred_fallthru
      _
    // Predicated region
    $region18: #{_residual_mlp.1} parent=1 // pred_check
      _
    $region19: #{_residual_mlp.1} parent=1 // pred_check_branch
      %44 = sbr.rel (0) target = $region21
    $region20: #{_residual_mlp.1} parent=1 // pred_region
      _
    $region21: #{_residual_mlp.1} parent=1 // pred_fallthru
      _
    // Predicated region
    $region22: #{_residual_mlp.1} parent=1 // pred_check
      _
    $region23: #{_residual_mlp.1} parent=1 // pred_check_branch
      %46 = sbr.rel (0) target = $region25
    $region24: #{_residual_mlp.1} parent=1 // pred_region
      %48 = dma.done [#allocation3], 4096
    $region25: #{_residual_mlp.1} parent=1 // pred_fallthru
      _
    // Predicated region
    $region26: #{_residual_mlp.1} parent=1 // pred_check
      _
    $region27: #{_residual_mlp.1} parent=1 // pred_check_branch
      %50 = sbr.rel (0) target = $region29
    $region28: #{_residual_mlp.1} parent=1 // pred_region
      %52 = dma.done [#allocation6], 4096
    $region29: #{_residual_mlp.1} parent=1 // pred_fallthru
      _
    %v53 = vld [vmem:[%s0] sm:$0xff]
    %v54 = vld [vmem:[%s2] sm:$0x77]
    %v55 = vld [vmem:[%s4] sm:$0x7]
    %v56 = vld [vmem:[#allocation2] sm:$0xff]
    %v57 = vld [vmem:[#allocation2 + $0x8] sm:$0xff]
    %v58 = vld [vmem:[#allocation2 + $0x10] sm:$0xff]
    %v59 = vld [vmem:[#allocation2 + $0x18] sm:$0xff]
    %v60 = vld [vmem:[#allocation2 + $0x20] sm:$0xff]
    %v61 = vld [vmem:[#allocation2 + $0x28] sm:$0xff]
    %v62 = vld [vmem:[#allocation2 + $0x30] sm:$0xff]
    %v63 = vld [vmem:[#allocation2 + $0x38] sm:$0xff]
    %v64 = vld [vmem:[#allocation2 + $0x40] sm:$0xff]
    %v65 = vld [vmem:[#allocation2 + $0x48] sm:$0xff]
    %v66 = vld [vmem:[#allocation2 + $0x50] sm:$0xff]
    %v67 = vld [vmem:[#allocation2 + $0x58] sm:$0xff]
    %v68 = vld [vmem:[#allocation2 + $0x60] sm:$0xff]
    %v69 = vld [vmem:[#allocation2 + $0x68] sm:$0xff]
    %v70 = vld [vmem:[#allocation2 + $0x70] sm:$0xff]
    %v71 = vld [vmem:[#allocation2 + $0x78] sm:$0xff]
    %v72 = vld [vmem:[#allocation2 + $0x80] sm:$0xff]
    %v73 = vld [vmem:[#allocation2 + $0x88] sm:$0xff]
    %v74 = vld [vmem:[#allocation2 + $0x90] sm:$0xff]
    %v75 = vld [vmem:[#allocation2 + $0x98] sm:$0xff]
    %v76 = vld [vmem:[#allocation2 + $0xa0] sm:$0xff]
    %v77 = vld [vmem:[#allocation2 + $0xa8] sm:$0xff]
    %v78 = vld [vmem:[#allocation2 + $0xb0] sm:$0xff]
    %v79 = vld [vmem:[#allocation2 + $0xb8] sm:$0xff]
    %v80 = vld [vmem:[#allocation2 + $0xc0] sm:$0xff]
    %v81 = vld [vmem:[#allocation2 + $0xc8] sm:$0xff]
    %v82 = vld [vmem:[#allocation2 + $0xd0] sm:$0xff]
    %v83 = vld [vmem:[#allocation2 + $0xd8] sm:$0xff]
    %v84 = vld [vmem:[#allocation2 + $0xe0] sm:$0xff]
    %v85 = vld [vmem:[#allocation2 + $0xe8] sm:$0xff]
    %v86 = vld [vmem:[#allocation2 + $0xf0] sm:$0xff]
    %v87 = vld [vmem:[#allocation2 + $0xf8] sm:$0xff]
    %v89 = vperm.slane %v54, 0
    %v90 = vperm.slane %v54, 4
    %v93 = vperm.slane %v89, 0
    %v94 = vperm.slane %v90, 0
    %95 = vmatpush.msra.mxu0 %v86
    %96 = vmatpush.msra.mxu0 %v84
    %97 = vmatpush.msra.mxu0 %v82
    %98 = vmatpush.msra.mxu0 %v80
    %99 = vmatpush.msra.mxu0 %v78
    %100 = vmatpush.msra.mxu0 %v76
    %101 = vmatpush.msra.mxu0 %v74
    %102 = vmatpush.msra.mxu0 %v72
    %103 = vmatpush.msra.mxu0 %v70
    %104 = vmatpush.msra.mxu0 %v68
    %105 = vmatpush.msra.mxu0 %v66
    %106 = vmatpush.msra.mxu0 %v64
    %107 = vmatpush.msra.mxu0 %v62
    %108 = vmatpush.msra.mxu0 %v60
    %109 = vmatpush.msra.mxu0 %v58
    %110 = vmatpush.msra.mxu0 %v56
    %111 = vmatmul.f32.gmra.mxu0 %v53
    %v112 = vpop.f32.mrf.mxu0
    %v113 = vadd.f32 %v93, %v112
    %114 = vdwg.mxu0
    %115 = vmatpush.msra.mxu0 %v87
    %116 = vmatpush.msra.mxu0 %v85
    %117 = vmatpush.msra.mxu0 %v83
    %118 = vmatpush.msra.mxu0 %v81
    %119 = vmatpush.msra.mxu0 %v79
    %120 = vmatpush.msra.mxu0 %v77
    %121 = vmatpush.msra.mxu0 %v75
    %122 = vmatpush.msra.mxu0 %v73
    %123 = vmatpush.msra.mxu0 %v71
    %124 = vmatpush.msra.mxu0 %v69
    %125 = vmatpush.msra.mxu0 %v67
    %126 = vmatpush.msra.mxu0 %v65
    %127 = vmatpush.msra.mxu0 %v63
    %128 = vmatpush.msra.mxu0 %v61
    %129 = vmatpush.msra.mxu0 %v59
    %130 = vmatpush.msra.mxu0 %v57
    %131 = vmatmul.f32.gmra.mxu0 %v53
    %v132 = vpop.f32.mrf.mxu0
    %v133 = vadd.f32 %v94, %v132
    %134 = vdwg.mxu0
    %v135 = vadd.f32 %v113, %v133
    %136 = vadd.xlane.f32.xlu0 %v135
    %v137 = vpop.xlane.xlu0 %136
    %v138 = vrcp.pop 256.0
    %v139 = vmul.f32 256.0, %v138
    %v140 = vsub.f32 1.0, %v139
    %v141 = vmul.f32 %v138, %v140
    %v142 = vadd.f32 %v138, %v141
    %vm143 = vweird.f32 %v138
    %v144 = vsel %vm143, %v138, %v142
    %v145 = vmul.f32 %v137, %v144
    %v146 = vsub.f32 %v113, %v145
    %v147 = vsub.f32 %v133, %v145
    %v148 = vmul.f32 %v146, %v146
    %v149 = vmul.f32 %v147, %v147
    %v150 = vadd.f32 %v148, %v149
    %151 = vadd.xlane.f32.xlu0 %v150
    %v152 = vpop.xlane.xlu0 %151
    %v153 = vmul.f32 %v152, %v144
    %v154 = vadd.f32 %v153, 1e-05
    %v155 = vrsqrt.pop %v154
    %v156 = vmul.f32 %v155, %v154
    %v157 = vmul.f32 %v156, %v155
    %v158 = vmul.f32 0.5, %v157
    %v159 = vsub.f32 1.5, %v158
    %v160 = vmul.f32 %v155, %v159
    %vm161 = vweird.f32 %v154
    %vm162 = vweird.f32 %v155
    %vm163 = vmor %vm161, %vm162
    %v164 = vsel %vm163, %v155, %v160
    %v165 = vmul.f32 %v146, %v164
    %v166 = vmul.f32 %v147, %v164
    %v167 = vperm.slane %v54, 1
    %v168 = vperm.slane %v54, 5
    %v171 = vperm.slane %v167, 1
    %v172 = vperm.slane %v168, 1
    %v173 = vmul.f32 %v165, %v171
    %v174 = vmul.f32 %v166, %v172
    %v175 = vperm.slane %v54, 2
    %v176 = vperm.slane %v54, 6
    %v179 = vperm.slane %v175, 2
    %v180 = vperm.slane %v176, 2
    %v181 = vadd.f32 %v173, %v179
    %v182 = vadd.f32 %v174, %v180
    %v183 = vmul.f32 %v181, 0.5
    %v184 = vmul.f32 %v182, 0.5
    %v185 = vmul.f32 %v181, 0.70710677
    %v186 = vmul.f32 %v182, 0.70710677
    %v187 = vmul.f32 %v185, %v185
    %v188 = vmin.f32 16.0, %v187
    %v189 = vmul.f32 %v188, 2.1237322e-06
    %v190 = vadd.f32 %v189, 0.00028619796
    %v191 = vmul.f32 %v188, %v190
    %v192 = vadd.f32 %v191, 0.0036580483
    %v193 = vmul.f32 %v188, %v192
    %v194 = vadd.f32 %v193, 0.05243302
    %v195 = vmul.f32 %v188, %v194
    %v196 = vadd.f32 %v195, 0.18741608
    %v197 = vmul.f32 %v188, %v196
    %v198 = vadd.f32 %v197, 1.1283791
    %v199 = vmul.f32 %v185, %v198
    %v200 = vmul.f32 %v188, 3.8918573e-05
    %v201 = vadd.f32 %v200, 0.001143296
    %v202 = vmul.f32 %v188, %v201
    %v203 = vadd.f32 %v202, 0.014752088
    %v204 = vmul.f32 %v188, %v203
    %v205 = vadd.f32 %v204, 0.112945676
    %v206 = vmul.f32 %v188, %v205
    %v207 = vadd.f32 %v206, 0.4994258
    %v208 = vmul.f32 %v188, %v207
    %v209 = vadd.f32 %v208, 1.0
    %v210 = vrcp.pop %v209
    %v211 = vmul.f32 %v209, %v210
    %v212 = vsub.f32 1.0, %v211
    %v213 = vmul.f32 %v210, %v212
    %v214 = vadd.f32 %v210, %v213
    %vm215 = vweird.f32 %v209
    %vm216 = vweird.f32 %v210
    %vm217 = vmor %vm215, %vm216
    %v218 = vsel %vm217, %v210, %v214
    %v219 = vand.u32 2147483647, %v209
    %vm220 = vcmp.eq.f32.partialorder %v219, 8.507059e+37
    %v221 = vand.u32 %v209, 2147483648
    %v222 = vor.u32 1.1754944e-38, %v221
    %v223 = vsel %vm220, %v222, %v218
    %v224 = vmul.f32 %v199, %v223
    %v225 = vmin.f32 %v224, 1.0
    %v226 = vmax.f32 %v225, -1.0
    %v227 = vmul.f32 %v186, %v186
    %v228 = vmin.f32 16.0, %v227
    %v229 = vmul.f32 %v228, 2.1237322e-06
    %v230 = vadd.f32 %v229, 0.00028619796
    %v231 = vmul.f32 %v228, %v230
    %v232 = vadd.f32 %v231, 0.0036580483
    %v233 = vmul.f32 %v228, %v232
    %v234 = vadd.f32 %v233, 0.05243302
    %v235 = vmul.f32 %v228, %v234
    %v236 = vadd.f32 %v235, 0.18741608
    %v237 = vmul.f32 %v228, %v236
    %v238 = vadd.f32 %v237, 1.1283791
    %v239 = vmul.f32 %v186, %v238
    %v240 = vmul.f32 %v228, 3.8918573e-05
    %v241 = vadd.f32 %v240, 0.001143296
    %v242 = vmul.f32 %v228, %v241
    %v243 = vadd.f32 %v242, 0.014752088
    %v244 = vmul.f32 %v228, %v243
    %v245 = vadd.f32 %v244, 0.112945676
    %v246 = vmul.f32 %v228, %v245
    %v247 = vadd.f32 %v246, 0.4994258
    %v248 = vmul.f32 %v228, %v247
    %v249 = vadd.f32 %v248, 1.0
    %v250 = vrcp.pop %v249
    %v251 = vmul.f32 %v249, %v250
    %v252 = vsub.f32 1.0, %v251
    %v253 = vmul.f32 %v250, %v252
    %v254 = vadd.f32 %v250, %v253
    %vm255 = vweird.f32 %v249
    %vm256 = vweird.f32 %v250
    %vm257 = vmor %vm255, %vm256
    %v258 = vsel %vm257, %v250, %v254
    %v259 = vand.u32 2147483647, %v249
    %vm260 = vcmp.eq.f32.partialorder %v259, 8.507059e+37
    %v261 = vand.u32 %v249, 2147483648
    %v262 = vor.u32 1.1754944e-38, %v261
    %v263 = vsel %vm260, %v262, %v258
    %v264 = vmul.f32 %v239, %v263
    %v265 = vmin.f32 %v264, 1.0
    %v266 = vmax.f32 %v265, -1.0
    %v267 = vadd.f32 %v226, 1.0
    %v268 = vadd.f32 %v266, 1.0
    %v269 = vmul.f32 %v183, %v267
    %v270 = vmul.f32 %v184, %v268
    %v271 = vld [vmem:[#allocation5] sm:$0xff]
    %v272 = vld [vmem:[#allocation5 + $0x8] sm:$0xff]
    %v273 = vld [vmem:[#allocation5 + $0x10] sm:$0xff]
    %v274 = vld [vmem:[#allocation5 + $0x18] sm:$0xff]
    %v275 = vld [vmem:[#allocation5 + $0x20] sm:$0xff]
    %v276 = vld [vmem:[#allocation5 + $0x28] sm:$0xff]
    %v277 = vld [vmem:[#allocation5 + $0x30] sm:$0xff]
    %v278 = vld [vmem:[#allocation5 + $0x38] sm:$0xff]
    %v279 = vld [vmem:[#allocation5 + $0x40] sm:$0xff]
    %v280 = vld [vmem:[#allocation5 + $0x48] sm:$0xff]
    %v281 = vld [vmem:[#allocation5 + $0x50] sm:$0xff]
    %v282 = vld [vmem:[#allocation5 + $0x58] sm:$0xff]
    %v283 = vld [vmem:[#allocation5 + $0x60] sm:$0xff]
    %v284 = vld [vmem:[#allocation5 + $0x68] sm:$0xff]
    %v285 = vld [vmem:[#allocation5 + $0x70] sm:$0xff]
    %v286 = vld [vmem:[#allocation5 + $0x78] sm:$0xff]
    %v287 = vld [vmem:[#allocation5 + $0x80] sm:$0xff]
    %v288 = vld [vmem:[#allocation5 + $0x88] sm:$0xff]
    %v289 = vld [vmem:[#allocation5 + $0x90] sm:$0xff]
    %v290 = vld [vmem:[#allocation5 + $0x98] sm:$0xff]
    %v291 = vld [vmem:[#allocation5 + $0xa0] sm:$0xff]
    %v292 = vld [vmem:[#allocation5 + $0xa8] sm:$0xff]
    %v293 = vld [vmem:[#allocation5 + $0xb0] sm:$0xff]
    %v294 = vld [vmem:[#allocation5 + $0xb8] sm:$0xff]
    %v295 = vld [vmem:[#allocation5 + $0xc0] sm:$0xff]
    %v296 = vld [vmem:[#allocation5 + $0xc8] sm:$0xff]
    %v297 = vld [vmem:[#allocation5 + $0xd0] sm:$0xff]
    %v298 = vld [vmem:[#allocation5 + $0xd8] sm:$0xff]
    %v299 = vld [vmem:[#allocation5 + $0xe0] sm:$0xff]
    %v300 = vld [vmem:[#allocation5 + $0xe8] sm:$0xff]
    %v301 = vld [vmem:[#allocation5 + $0xf0] sm:$0xff]
    %v302 = vld [vmem:[#allocation5 + $0xf8] sm:$0xff]
    %v303 = vperm.slane %v55, 0
    %304 = vmatpush.msra.mxu0 %v286
    %305 = vmatpush.msra.mxu0 %v285
    %306 = vmatpush.msra.mxu0 %v284
    %307 = vmatpush.msra.mxu0 %v283
    %308 = vmatpush.msra.mxu0 %v282
    %309 = vmatpush.msra.mxu0 %v281
    %310 = vmatpush.msra.mxu0 %v280
    %311 = vmatpush.msra.mxu0 %v279
    %312 = vmatpush.msra.mxu0 %v278
    %313 = vmatpush.msra.mxu0 %v277
    %314 = vmatpush.msra.mxu0 %v276
    %315 = vmatpush.msra.mxu0 %v275
    %316 = vmatpush.msra.mxu0 %v274
    %317 = vmatpush.msra.mxu0 %v273
    %318 = vmatpush.msra.mxu0 %v272
    %319 = vmatpush.msra.mxu0 %v271
    %320 = vmatmul.f32.gmra.mxu0 %v269
    %v321 = vpop.f32.mrf.mxu0
    %v322 = vadd.f32 %v303, %v321
    %323 = vdwg.mxu0
    %324 = vmatpush.msra.mxu0 %v302
    %325 = vmatpush.msra.mxu0 %v301
    %326 = vmatpush.msra.mxu0 %v300
    %327 = vmatpush.msra.mxu0 %v299
    %328 = vmatpush.msra.mxu0 %v298
    %329 = vmatpush.msra.mxu0 %v297
    %330 = vmatpush.msra.mxu0 %v296
    %331 = vmatpush.msra.mxu0 %v295
    %332 = vmatpush.msra.mxu0 %v294
    %333 = vmatpush.msra.mxu0 %v293
    %334 = vmatpush.msra.mxu0 %v292
    %335 = vmatpush.msra.mxu0 %v291
    %336 = vmatpush.msra.mxu0 %v290
    %337 = vmatpush.msra.mxu0 %v289
    %338 = vmatpush.msra.mxu0 %v288
    %339 = vmatpush.msra.mxu0 %v287
    %340 = vmatmul.f32.gmra.mxu0 %v270
    %v341 = vpop.f32.mrf.mxu0
    %v342 = vadd.f32 %v322, %v341
    %343 = vdwg.mxu0
    %v344 = vadd.f32 %v342, %v53
    %345 = vadd.xlane.f32.xlu0 %v344
    %v346 = vpop.xlane.xlu0 %345
    %v347 = vrcp.pop 128.0
    %v348 = vmul.f32 128.0, %v347
    %v349 = vsub.f32 1.0, %v348
    %v350 = vmul.f32 %v347, %v349
    %v351 = vadd.f32 %v347, %v350
    %vm352 = vweird.f32 %v347
    %v353 = vsel %vm352, %v347, %v351
    %v354 = vmul.f32 %v346, %v353
    %v355 = vsub.f32 %v344, %v354
    %v356 = vmul.f32 %v355, %v355
    %357 = vadd.xlane.f32.xlu0 %v356
    %v358 = vpop.xlane.xlu0 %357
    %v359 = vmul.f32 %v358, %v353
    %v360 = vadd.f32 %v359, 1e-05
    %v361 = vrsqrt.pop %v360
    %v362 = vmul.f32 %v361, %v360
    %v363 = vmul.f32 %v362, %v361
    %v364 = vmul.f32 0.5, %v363
    %v365 = vsub.f32 1.5, %v364
    %v366 = vmul.f32 %v361, %v365
    %vm367 = vweird.f32 %v360
    %vm368 = vweird.f32 %v361
    %vm369 = vmor %vm367, %vm368
    %v370 = vsel %vm369, %v361, %v366
    %v371 = vmul.f32 %v355, %v370
    %v372 = vperm.slane %v55, 1
    %v373 = vmul.f32 %v371, %v372
    %v374 = vperm.slane %v55, 2
    %v375 = vadd.f32 %v373, %v374
    %376 = vst [vmem:[#allocation7] sm:$0xff] %v375
    // Predicated region
    $region30: #{_residual_mlp.1} parent=1 // pred_check
      _
    $region31: #{_residual_mlp.1} parent=1 // pred_check_branch
      %378 = sbr.rel (0) target = $region33
    $region32: #{_residual_mlp.1} parent=1 // pred_region
      %380 = vsyncadd [#allocation4], 0
      %s382 = sshll.u32 [#allocation7], 4
      %s383 = int_to_ptr.vmem [resolvable:$true] %s382
      %s384 = sshll.u32 %s5, 4
      %s385 = int_to_ptr.hbm [resolvable:$true] %s384
      %387 = dma.vmem_to_hbm [thread:$0]  %s383, 128, %s385, [#allocation4]
    $region33: #{_residual_mlp.1} parent=1 // pred_fallthru
      _
    // Predicated region
    $region34: #{_residual_mlp.1} parent=1 // pred_check
      _
    $region35: #{_residual_mlp.1} parent=1 // pred_check_branch
      %389 = sbr.rel (0) target = $region37
    $region36: #{_residual_mlp.1} parent=1 // pred_region
      %391 = dma.done [#allocation4], 128
    $region37: #{_residual_mlp.1} parent=1 // pred_fallthru
      _
    %392 = vsyncpa [#allocation3], 1
    %393 = vsyncpa [#allocation6], 1
    %394 = vsyncpa [#allocation4], 1

</llo_original>
